<compile_context>
chip_gen: v7x
topology: tpu7x:2x2x1
jax: 0.10.0
libtpu: 0.0.40
codegen_flags: <defaults>
</compile_context>

<pallas_src>
import functools

import jax
import jax.numpy as jnp
import numpy as np
from jax import lax
from jax.experimental import pallas as pl
from jax.experimental.pallas import tpu as pltpu

_BIG = 1e30  # sentinel pad value (assumes real |ratio| values are << 1e30)


def _round_up(x, m):
    return ((x + m - 1) // m) * m


def _pred_loss_kernel(x_col_ref, x_row_ref, r_col_ref, r_row_ref,
                      rank_ref, sq_ref, acc_ref, *, strip):
    """Grid (i, j): i = row block ("parallel"), j = col block ("arbitrary").

    Outputs (both (1, 1, 1) blocks indexed by i only, resident across j):
      rank_ref : sum over this row block of BCEWithLogits terms
      sq_ref   : sum over this row block of (ratio_out - ratio)^2
    acc_ref    : (strip, tn) f32 running sum, reduced once at j == gj-1.
    """
    j = pl.program_id(1)
    tm = x_col_ref.shape[0]
    num_strips = tm // strip

    x_row = x_row_ref[...]          # (1, tn) f32
    r_row = r_row_ref[...]          # (1, tn) f32

    # --- per row block init: zero the accumulator, RMSE partial (once) ---
    @pl.when(j == 0)
    def _():
        acc_ref[...] = jnp.zeros_like(acc_ref)
        d = x_col_ref[...] - r_col_ref[...]     # (tm, 1); sentinel rows give 0
        sq_ref[...] = jnp.zeros_like(sq_ref) + jnp.sum(d * d)

    # --- pairwise BCE-with-logits, strip-mined over rows ---
    def strip_body(s, acc):
        row0 = pl.multiple_of(s * strip, strip)
        xc = x_col_ref[pl.ds(row0, strip), :]   # (strip, 1)
        rc = r_col_ref[pl.ds(row0, strip), :]   # (strip, 1)
        pair = xc - x_row                       # (strip, tn) logits
        s_ij = rc - r_row                       # (strip, tn) label logits
        # BCEWithLogits(x, y=1[s>0]) == softplus(where(s>0, -x, x))
        #   = max(z, 0) + log1p(exp(-|z|)),  and |z| == |pair|.
        softplus = jnp.log1p(jnp.exp(-jnp.abs(pair)))
        z = jnp.where(s_ij > 0.0, -pair, pair)
        return acc + (jnp.maximum(z, 0.0) + softplus)

    if num_strips % 4 == 0:
        unroll = 4
    elif num_strips % 2 == 0:
        unroll = 2
    else:
        unroll = 1
    acc_ref[...] = lax.fori_loop(0, num_strips, strip_body, acc_ref[...],
                                 unroll=unroll)

    # --- finalize once per row block: single XLU reduce + scalar store ---
    @pl.when(j == pl.num_programs(1) - 1)
    def _():
        rank_ref[...] = jnp.zeros_like(rank_ref) + jnp.sum(acc_ref[...])


def pred_loss(ratio_out, ratio, alpha, *, tm=1024, tn=1024, strip=8):
    """Pallas implementation of PredLoss.forward. Returns a scalar (f32)."""
    x = jnp.reshape(ratio_out, (-1,)).astype(jnp.float32)
    r = jnp.reshape(ratio, (-1,)).astype(jnp.float32)
    n = x.shape[0]

    # Tile sizes: lane-dense columns (multiple of 128), sublane-aligned rows,
    # clamped for small N.  Keep >= 2 row blocks when the problem is big
    # enough so the "parallel" i axis can use both TensorCores on v7x.
    tm = min(tm, _round_up(n, strip))
    tn = min(tn, _round_up(n, 128))
    if n >= 512 and tm >= _round_up(n, strip):
        tm = _round_up(-(-n // 2), strip)
    n_pad_m = _round_up(n, tm)
    n_pad_n = _round_up(n, tn)
    gi = n_pad_m // tm
    gj = n_pad_n // tn

    # Sentinel padding instead of per-tile masking:
    #   row direction (column vectors)  -> pad x and r with -BIG
    #   col direction (row vectors)     -> pad x and r with +BIG
    # Every padded pair then has s_ij < 0 (label 0) and pair <= -BIG, so
    # bce = max(pair, 0) + log1p(exp(-|pair|)) == 0 exactly, and the RMSE
    # difference x_col - r_col == 0 on padded rows.  Divisors stay N, N*N.
    x_col = jnp.pad(x, (0, n_pad_m - n), constant_values=-_BIG).reshape(n_pad_m, 1)
    r_col = jnp.pad(r, (0, n_pad_m - n), constant_values=-_BIG).reshape(n_pad_m, 1)
    x_row = jnp.pad(x, (0, n_pad_n - n), constant_values=_BIG).reshape(1, n_pad_n)
    r_row = jnp.pad(r, (0, n_pad_n - n), constant_values=_BIG).reshape(1, n_pad_n)

    kernel = functools.partial(_pred_loss_kernel, strip=strip)

    rank_parts, sq_parts = pl.pallas_call(
        kernel,
        out_shape=(
            jax.ShapeDtypeStruct((gi, 1, 1), jnp.float32),  # rank partial sums
            jax.ShapeDtypeStruct((gi, 1, 1), jnp.float32),  # sq-diff partials
        ),
        grid_spec=pltpu.PrefetchScalarGridSpec(
            num_scalar_prefetch=0,
            grid=(gi, gj),
            in_specs=[
                pl.BlockSpec((tm, 1), lambda i, j: (i, 0)),   # x_col
                pl.BlockSpec((1, tn), lambda i, j: (0, j)),   # x_row
                pl.BlockSpec((tm, 1), lambda i, j: (i, 0)),   # r_col
                pl.BlockSpec((1, tn), lambda i, j: (0, j)),   # r_row
            ],
            out_specs=[
                pl.BlockSpec((1, 1, 1), lambda i, j: (i, 0, 0)),
                pl.BlockSpec((1, 1, 1), lambda i, j: (i, 0, 0)),
            ],
            scratch_shapes=[pltpu.VMEM((strip, tn), jnp.float32)],
        ),
        compiler_params=pltpu.CompilerParams(
            dimension_semantics=("parallel", "arbitrary")),
    )(x_col, x_row, r_col, r_row)

    # O(grid_i) finalize in plain JAX: exact divisors N and N*N, sqrt, blend.
    alpha = jnp.asarray(alpha, jnp.float32)
    pred = jnp.sqrt(jnp.sum(sq_parts) / n)
    rank = jnp.sum(rank_parts) / (n * n)
    return (1.0 - alpha) * pred + alpha * rank


def _pred_loss_ref(ratio_out, ratio, alpha):
    """Pure-JAX f32 reference mirroring the PyTorch forward."""
    ratio_out = ratio_out.astype(jnp.float32)
    ratio = ratio.astype(jnp.float32)
    pred = jnp.sqrt(jnp.mean((ratio_out - ratio) ** 2))
    s_ij = ratio - ratio.T
    y = jnp.where(s_ij > 0, 1.0, 0.0)
    xl = ratio_out - ratio_out.T
    bce = jnp.maximum(xl, 0.0) - xl * y + jnp.log1p(jnp.exp(-jnp.abs(xl)))
    rank = jnp.mean(bce)
    return (1.0 - alpha) * pred + alpha * rank


if __name__ == "__main__":
    key = jax.random.PRNGKey(0)
    k1, k2 = jax.random.split(key)

    # Primary check: small (N, 1) column-vector inputs as the module implies.
    N = 8
    ratio_out = jax.random.normal(k1, (N, 1), dtype=jnp.float32)
    ratio = jax.random.normal(k2, (N, 1), dtype=jnp.float32)
    alpha = 0.3
    out = jax.block_until_ready(pred_loss(ratio_out, ratio, alpha))
    ref = _pred_loss_ref(ratio_out, ratio, alpha)
    assert np.allclose(np.asarray(out), np.asarray(ref), rtol=1e-4, atol=1e-4), (
        f"mismatch (N={N}): pallas={out} ref={ref}")

    # Secondary check: unaligned N with a multi-block grid to exercise the
    # sentinel padding, the j-resident accumulator and the strip loop.
    N2 = 200
    ro2 = jax.random.normal(jax.random.PRNGKey(1), (N2, 1), dtype=jnp.float32)
    r2 = jax.random.normal(jax.random.PRNGKey(2), (N2, 1), dtype=jnp.float32)
    out2 = jax.block_until_ready(pred_loss(ro2, r2, 0.5, tm=64, tn=128))
    ref2 = _pred_loss_ref(ro2, r2, 0.5)
    assert np.allclose(np.asarray(out2), np.asarray(ref2), rtol=1e-4, atol=1e-4), (
        f"mismatch (N={N2}): pallas={out2} ref={ref2}")

    print("KERNEL_OK")
</pallas_src>

<mosaic_0001>
module attributes {stable_mosaic.version = 11 : i64} {
  func.func @_pred_loss_kernel(%arg0: i32, %arg1: i32, %arg2: memref<8x1xf32, #tpu.memory_space<vmem>>, %arg3: memref<1x128xf32, #tpu.memory_space<vmem>>, %arg4: memref<8x1xf32, #tpu.memory_space<vmem>>, %arg5: memref<1x128xf32, #tpu.memory_space<vmem>>, %arg6: memref<1x1x1xf32, #tpu.memory_space<vmem>>, %arg7: memref<1x1x1xf32, #tpu.memory_space<vmem>>, %arg8: memref<8x128xf32, #tpu.memory_space<vmem>>) attributes {dimension_semantics = [#tpu.dimension_semantics<parallel>, #tpu.dimension_semantics<arbitrary>], iteration_bounds = array<i64: 1, 1>, scalar_prefetch = 0 : i64, scratch_operands = 1 : i64, tpu.core_type = #tpu.core_type<tc>, window_params = [{transform_indices = @transform_0, window_bounds = array<i64: 8, 1>}, {transform_indices = @transform_1, window_bounds = array<i64: 1, 128>}, {transform_indices = @transform_2, window_bounds = array<i64: 8, 1>}, {transform_indices = @transform_3, window_bounds = array<i64: 1, 128>}, {transform_indices = @transform_4, window_bounds = array<i64: 1, 1, 1>}, {transform_indices = @transform_5, window_bounds = array<i64: 1, 1, 1>}]} {
    %c0 = arith.constant 0 : index
    %c0_0 = arith.constant 0 : index
    %0 = vector.load %arg3[%c0, %c0_0] : memref<1x128xf32, #tpu.memory_space<vmem>>, vector<1x128xf32>
    %c0_1 = arith.constant 0 : index
    %c0_2 = arith.constant 0 : index
    %1 = vector.load %arg5[%c0_1, %c0_2] : memref<1x128xf32, #tpu.memory_space<vmem>>, vector<1x128xf32>
    %c0_i32 = arith.constant 0 : i32
    %2 = arith.cmpi eq, %arg1, %c0_i32 : i32
    %3 = arith.extui %2 : i1 to i32
    %c0_i32_3 = arith.constant 0 : i32
    %4 = arith.cmpi ne, %3, %c0_i32_3 : i32
    scf.if %4 {
      %cst_16 = arith.constant 0.000000e+00 : f32
      %36 = vector.broadcast %cst_16 : f32 to vector<8x128xf32>
      %c0_17 = arith.constant 0 : index
      %c0_18 = arith.constant 0 : index
      %37 = vector.load %arg8[%c0_17, %c0_18] : memref<8x128xf32, #tpu.memory_space<vmem>>, vector<8x128xf32>
      tpu.vector_store %arg8[%c0_17, %c0_18], %36 {strides = array<i32>} : memref<8x128xf32, #tpu.memory_space<vmem>>, vector<8x128xf32>,
      %c0_19 = arith.constant 0 : index
      %c0_20 = arith.constant 0 : index
      %38 = vector.load %arg2[%c0_19, %c0_20] : memref<8x1xf32, #tpu.memory_space<vmem>>, vector<8x1xf32>
      %c0_21 = arith.constant 0 : index
      %c0_22 = arith.constant 0 : index
      %39 = vector.load %arg4[%c0_21, %c0_22] : memref<8x1xf32, #tpu.memory_space<vmem>>, vector<8x1xf32>
      %40 = arith.subf %38, %39 : vector<8x1xf32>
      %cst_23 = arith.constant 0.000000e+00 : f32
      %41 = vector.broadcast %cst_23 : f32 to vector<1x1x1xf32>
      %42 = arith.mulf %40, %40 : vector<8x1xf32>
      %43 = vector.shape_cast %42 : vector<8x1xf32> to vector<1x8x1xf32>
      %cst_24 = arith.constant dense<0.000000e+00> : vector<1xf32>
      %44 = vector.multi_reduction <add>, %43, %cst_24 [1, 2] : vector<1x8x1xf32> to vector<1xf32>
      %45 = vector.shape_cast %44 : vector<1xf32> to vector<1x1x1xf32>
      %46 = vector.extract %45[0, 0, 0] : f32 from vector<1x1x1xf32>
      %47 = vector.broadcast %46 : f32 to vector<1x1x1xf32>
      %48 = arith.addf %41, %47 : vector<1x1x1xf32>
      %c0_25 = arith.constant 0 : index
      %c0_26 = arith.constant 0 : index
      %c0_27 = arith.constant 0 : index
      %49 = vector.load %arg7[%c0_25, %c0_26, %c0_27] : memref<1x1x1xf32, #tpu.memory_space<vmem>>, vector<1x1x1xf32>
      tpu.vector_store %arg7[%c0_25, %c0_26, %c0_27], %48 {strides = array<i32>} : memref<1x1x1xf32, #tpu.memory_space<vmem>>, vector<1x1x1xf32>,
    } else {
    }
    %c0_4 = arith.constant 0 : index
    %c0_5 = arith.constant 0 : index
    %5 = vector.load %arg8[%c0_4, %c0_5] : memref<8x128xf32, #tpu.memory_space<vmem>>, vector<8x128xf32>
    %c0_i32_6 = arith.constant 0 : i32
    %c8_i32 = arith.constant 8 : i32
    %6 = arith.muli %c0_i32_6, %c8_i32 : i32
    %7 = tpu.assume_multiple %6, 8 : i32
    %8 = arith.index_cast %7 : i32 to index
    %c0_7 = arith.constant 0 : index
    %9 = vector.load %arg2[%8, %c0_7] : memref<8x1xf32, #tpu.memory_space<vmem>>, vector<8x1xf32>
    %10 = arith.index_cast %7 : i32 to index
    %c0_8 = arith.constant 0 : index
    %11 = vector.load %arg4[%10, %c0_8] : memref<8x1xf32, #tpu.memory_space<vmem>>, vector<8x1xf32>
    %12 = vector.broadcast %9 : vector<8x1xf32> to vector<8x128xf32>
    %13 = vector.broadcast %0 : vector<1x128xf32> to vector<8x128xf32>
    %14 = arith.subf %12, %13 : vector<8x128xf32>
    %15 = vector.broadcast %11 : vector<8x1xf32> to vector<8x128xf32>
    %16 = vector.broadcast %1 : vector<1x128xf32> to vector<8x128xf32>
    %17 = arith.subf %15, %16 : vector<8x128xf32>
    %18 = math.absf %14 : vector<8x128xf32>
    %cst = arith.constant 0.000000e+00 : f32
    %19 = vector.broadcast %cst : f32 to vector<8x128xf32>
    %20 = arith.subf %19, %18 : vector<8x128xf32>
    %21 = math.exp %20 : vector<8x128xf32>
    %22 = math.log1p %21 : vector<8x128xf32>
    %cst_9 = arith.constant 0.000000e+00 : f32
    %23 = vector.broadcast %cst_9 : f32 to vector<8x128xf32>
    %24 = arith.cmpf ogt, %17, %23 : vector<8x128xf32>
    %cst_10 = arith.constant 0.000000e+00 : f32
    %25 = vector.broadcast %cst_10 : f32 to vector<8x128xf32>
    %26 = arith.subf %25, %14 : vector<8x128xf32>
    %27 = arith.select %24, %26, %14 : vector<8x128xi1>, vector<8x128xf32>
    %cst_11 = arith.constant 0.000000e+00 : f32
    %28 = vector.broadcast %cst_11 : f32 to vector<8x128xf32>
    %29 = arith.maximumf %27, %28 : vector<8x128xf32>
    %30 = arith.addf %29, %22 : vector<8x128xf32>
    %31 = arith.addf %5, %30 : vector<8x128xf32>
    %c1_i32 = arith.constant 1 : i32
    %c0_12 = arith.constant 0 : index
    %c0_13 = arith.constant 0 : index
    %32 = vector.load %arg8[%c0_12, %c0_13] : memref<8x128xf32, #tpu.memory_space<vmem>>, vector<8x128xf32>
    tpu.vector_store %arg8[%c0_12, %c0_13], %31 {strides = array<i32>} : memref<8x128xf32, #tpu.memory_space<vmem>>, vector<8x128xf32>,
    %c0_i32_14 = arith.constant 0 : i32
    %33 = arith.cmpi eq, %arg1, %c0_i32_14 : i32
    %34 = arith.extui %33 : i1 to i32
    %c0_i32_15 = arith.constant 0 : i32
    %35 = arith.cmpi ne, %34, %c0_i32_15 : i32
    scf.if %35 {
      %cst_16 = arith.constant 0.000000e+00 : f32
      %36 = vector.broadcast %cst_16 : f32 to vector<1x1x1xf32>
      %c0_17 = arith.constant 0 : index
      %c0_18 = arith.constant 0 : index
      %37 = vector.load %arg8[%c0_17, %c0_18] : memref<8x128xf32, #tpu.memory_space<vmem>>, vector<8x128xf32>
      %38 = vector.shape_cast %37 : vector<8x128xf32> to vector<1x8x128xf32>
      %cst_19 = arith.constant dense<0.000000e+00> : vector<1xf32>
      %39 = vector.multi_reduction <add>, %38, %cst_19 [1, 2] : vector<1x8x128xf32> to vector<1xf32>
      %40 = vector.shape_cast %39 : vector<1xf32> to vector<1x1x1xf32>
      %41 = vector.extract %40[0, 0, 0] : f32 from vector<1x1x1xf32>
      %42 = vector.broadcast %41 : f32 to vector<1x1x1xf32>
      %43 = arith.addf %36, %42 : vector<1x1x1xf32>
      %c0_20 = arith.constant 0 : index
      %c0_21 = arith.constant 0 : index
      %c0_22 = arith.constant 0 : index
      %44 = vector.load %arg6[%c0_20, %c0_21, %c0_22] : memref<1x1x1xf32, #tpu.memory_space<vmem>>, vector<1x1x1xf32>
      tpu.vector_store %arg6[%c0_20, %c0_21, %c0_22], %43 {strides = array<i32>} : memref<1x1x1xf32, #tpu.memory_space<vmem>>, vector<1x1x1xf32>,
    } else {
    }
    return
  }
  func.func @transform_0(%arg0: i32, %arg1: i32) -> (i32, i32) {
    %c0_i32 = arith.constant 0 : i32
    %c0_i32_0 = arith.constant 0 : i32
    return %arg0, %c0_i32 : i32, i32
  }
  func.func @transform_1(%arg0: i32, %arg1: i32) -> (i32, i32) {
    %c0_i32 = arith.constant 0 : i32
    %c0_i32_0 = arith.constant 0 : i32
    return %c0_i32, %arg1 : i32, i32
  }
  func.func @transform_2(%arg0: i32, %arg1: i32) -> (i32, i32) {
    %c0_i32 = arith.constant 0 : i32
    %c0_i32_0 = arith.constant 0 : i32
    return %arg0, %c0_i32 : i32, i32
  }
  func.func @transform_3(%arg0: i32, %arg1: i32) -> (i32, i32) {
    %c0_i32 = arith.constant 0 : i32
    %c0_i32_0 = arith.constant 0 : i32
    return %c0_i32, %arg1 : i32, i32
  }
  func.func @transform_4(%arg0: i32, %arg1: i32) -> (i32, i32, i32) {
    %c0_i32 = arith.constant 0 : i32
    %c0_i32_0 = arith.constant 0 : i32
    %c0_i32_1 = arith.constant 0 : i32
    return %arg0, %c0_i32, %c0_i32_0 : i32, i32, i32
  }
  func.func @transform_5(%arg0: i32, %arg1: i32) -> (i32, i32, i32) {
    %c0_i32 = arith.constant 0 : i32
    %c0_i32_0 = arith.constant 0 : i32
    %c0_i32_1 = arith.constant 0 : i32
    return %arg0, %c0_i32, %c0_i32_0 : i32, i32, i32
  }
}

</mosaic_0001>

<llo_original>
// kernel: tpu_custom_call.1
$region0: #{tpu_custom_call.1}
  #allocation0 [shape = 'u32[]', space=smem, size = 0x4, offset = 0x4, fixed_abs, tag = 'smem constant byte address 0x4 - core index']
  #allocation1 [shape = 'u32[144,128]{1,0:T(1,128)}', space=vmem, size = 0x12000, scoped, tag = 'internal scratch']
  #allocation2 [shape = 'f32[8,128]{1,0:T(8,128)}', space=vmem, size = 0x1000, scoped, tag = 'scratch operand']
  %s0 = inlined_call_operand.vmem [shape: f32[8,1], index: 0, kind: input, shape index: {}]
  %s1 = inlined_call_operand.vmem [shape: f32[1,128], index: 1, kind: input, shape index: {}]
  %s2 = inlined_call_operand.vmem [shape: f32[8,1], index: 2, kind: input, shape index: {}]
  %s3 = inlined_call_operand.vmem [shape: f32[1,128], index: 3, kind: input, shape index: {}]
  %s4 = inlined_call_operand.hbm [shape: f32[1,1,1], index: 4, kind: output, shape index: {0}]
  %s5 = inlined_call_operand.hbm [shape: f32[1,1,1], index: 5, kind: output, shape index: {1}]
  %6 = xla_tuple %s4, %s5
  %s7 = sld [smem:[#allocation0]]
  $region42: #{tpu_custom_call.1} parent=0
    _
  %s9 = ssub.s32 1, %s7
  %s10 = scalar_select 0, %s9, %s7
  $region1: #{tpu_custom_call.1} parent=0
    #allocation3 [shape = 'u8[512]{0}', space=vmem, size = 0x400, scoped, tag = 'output window, operand 0, single buffered']
    #allocation4 [shape = 's32[1]{0}', space=sflag, size = 0x4, scoped, tag = 'scoped memory for tpu_custom_call.1']
    #allocation5 [shape = 'u8[512]{0}', space=vmem, size = 0x400, scoped, tag = 'output window, operand 1, single buffered']
    #allocation6 [shape = 's32[1]{0}', space=sflag, size = 0x4, scoped, tag = 'scoped memory for tpu_custom_call.1']
    %11 = vsyncpa [#allocation4], 0
    %12 = vsyncpa [#allocation6], 0
    // Predicated region
    $region2: #{tpu_custom_call.1} parent=1 // pred_check
      _
    $region3: #{tpu_custom_call.1} parent=1 // pred_check_branch
      %14 = sbr.rel (0) target = $region5
    $region4: #{tpu_custom_call.1} parent=1 // pred_region
      _
    $region5: #{tpu_custom_call.1} parent=1 // pred_fallthru
      _
    // Predicated region
    $region6: #{tpu_custom_call.1} parent=1 // pred_check
      _
    $region7: #{tpu_custom_call.1} parent=1 // pred_check_branch
      %16 = sbr.rel (0) target = $region9
    $region8: #{tpu_custom_call.1} parent=1 // pred_region
      _
    $region9: #{tpu_custom_call.1} parent=1 // pred_fallthru
      _
    // Predicated region
    $region10: #{tpu_custom_call.1} parent=1 // pred_check
      _
    $region11: #{tpu_custom_call.1} parent=1 // pred_check_branch
      %18 = sbr.rel (0) target = $region13
    $region12: #{tpu_custom_call.1} parent=1 // pred_region
      _
    $region13: #{tpu_custom_call.1} parent=1 // pred_fallthru
      _
    // Predicated region
    $region14: #{tpu_custom_call.1} parent=1 // pred_check
      _
    $region15: #{tpu_custom_call.1} parent=1 // pred_check_branch
      %20 = sbr.rel (0) target = $region17
    $region16: #{tpu_custom_call.1} parent=1 // pred_region
      _
    $region17: #{tpu_custom_call.1} parent=1 // pred_fallthru
      _
    %v21 = vld [vmem:[%s1] sm:$0x1]
    %v22 = vld [vmem:[%s3] sm:$0x1]
    %p23 = scmp.eq.s32.totalorder 0, 0
    // Predicated region
    $region18: #{tpu_custom_call.1} parent=1 // pred_check
      %p24 = pneg %p23
    $region19: #{tpu_custom_call.1} parent=1 // pred_check_branch
      %26 = sbr.rel (%p24) target = $region21
    $region20: #{tpu_custom_call.1} parent=1 // pred_region
      %27 = vst [vmem:[#allocation2] sm:$0xff] 0.0
      %v28 = vld [vmem:[%s0] sm:$0xff]
      %v29 = vld [vmem:[%s2] sm:$0xff]
      %v30 = vsub.f32 %v28, %v29
      %v31 = vmul.f32 %v30, %v30
      %vm32 = vcmask 7168
      %v33 = vsel %vm32, %v31, 0.0
      %34 = vadd.xlane.f32.xlu0 %v33
      %v35 = vpop.xlane.xlu0 %34
      %v36 = vrot.slane %v35, 4
      %v37 = vadd.f32 %v35, %v36
      %v38 = vrot.slane %v37, 2
      %v39 = vadd.f32 %v37, %v38
      %v40 = vrot.slane %v39, 1
      %v41 = vadd.f32 %v39, %v40
      %s42 = vtos %v41
      %v43 = vstv %s42
      %v44 = vadd.f32 %v43, 0.0
      %vm45 = vcmask 0
      %46 = vst.msk [vmem:[#allocation5] sm:$0x1] %vm45, %v44
    $region21: #{tpu_custom_call.1} parent=1 // pred_fallthru
      _
    %v47 = vld [vmem:[#allocation2] sm:$0xff]
    %v48 = vld [vmem:[%s0] sm:$0xff]
    %v49 = vld [vmem:[%s2] sm:$0xff]
    %51 = vset.pattern.permute.xlu0 0
    %52 = vperm.xlu0 %51, %v48
    %v53 = vpop.permute.xlu0 %52
    %v56 = vlaneseq
    %v57 = vshrl.u32 %v56, 7
    %v58 = vsub.s32 0, %v57
    %v59 = vrot.slane %v21, %v58
    %v61 = vsub.f32 %v53, %v59
    %63 = vset.pattern.permute.xlu0 0
    %64 = vperm.xlu0 %63, %v49
    %v65 = vpop.permute.xlu0 %64
    %v68 = vlaneseq
    %v69 = vshrl.u32 %v68, 7
    %v70 = vsub.s32 0, %v69
    %v71 = vrot.slane %v22, %v70
    %v73 = vsub.f32 %v65, %v71
    %v74 = vand.u32 2147483647, %v61
    %v75 = vsub.f32 0.0, %v74
    %v76 = vmul.f32 %v75, 1.442695
    %v77 = vpow.pop %v76
    %v78 = vadd.f32 %v77, 1.0
    %v79 = vlog2.pop %v78
    %v80 = vmul.f32 %v79, 0.6931472
    %v81 = vmul.f32 -0.5, %v77
    %v82 = vadd.f32 %v81, 1.0
    %v83 = vmul.f32 %v82, %v77
    %v84 = vand.u32 2147483647, %v77
    %vm85 = vcmp.lt.f32.partialorder %v84, 0.0004427343
    %v86 = vsel %vm85, %v83, %v80
    %vm87 = vcmp.gt.f32.partialorder %v73, 0.0
    %v88 = vsub.f32 0.0, %v61
    %v89 = vsel %vm87, %v88, %v61
    %v90 = vmax.f32 %v89, 0.0
    %v91 = vadd.f32 %v90, %v86
    %v92 = vadd.f32 %v47, %v91
    %93 = vst [vmem:[#allocation2] sm:$0xff] %v92
    // Predicated region
    $region22: #{tpu_custom_call.1} parent=1 // pred_check
      %p94 = pneg %p23
    $region23: #{tpu_custom_call.1} parent=1 // pred_check_branch
      %96 = sbr.rel (%p94) target = $region25
    $region24: #{tpu_custom_call.1} parent=1 // pred_region
      %v97 = vld [vmem:[#allocation2] sm:$0xff]
      %98 = vadd.xlane.f32.xlu0 %v97
      %v99 = vpop.xlane.xlu0 %98
      %v100 = vrot.slane %v99, 4
      %v101 = vadd.f32 %v99, %v100
      %v102 = vrot.slane %v101, 2
      %v103 = vadd.f32 %v101, %v102
      %v104 = vrot.slane %v103, 1
      %v105 = vadd.f32 %v103, %v104
      %s106 = vtos %v105
      %v107 = vstv %s106
      %v108 = vadd.f32 %v107, 0.0
      %vm109 = vcmask 0
      %110 = vst.msk [vmem:[#allocation3] sm:$0x1] %vm109, %v108
    $region25: #{tpu_custom_call.1} parent=1 // pred_fallthru
      _
    // Predicated region
    $region26: #{tpu_custom_call.1} parent=1 // pred_check
      _
    $region27: #{tpu_custom_call.1} parent=1 // pred_check_branch
      %112 = sbr.rel (0) target = $region29
    $region28: #{tpu_custom_call.1} parent=1 // pred_region
      %s114 = ssub.s32 16, 16
      %115 = vsyncadd [#allocation4], %s114
      %s117 = sshll.u32 [#allocation3], 4
      %s118 = int_to_ptr.vmem [resolvable:$true] %s117
      %120 = dma.vmem_to_hbm [thread:$0]  %s118, 16, %s4, [#allocation4]
    $region29: #{tpu_custom_call.1} parent=1 // pred_fallthru
      _
    // Predicated region
    $region30: #{tpu_custom_call.1} parent=1 // pred_check
      _
    $region31: #{tpu_custom_call.1} parent=1 // pred_check_branch
      %122 = sbr.rel (0) target = $region33
    $region32: #{tpu_custom_call.1} parent=1 // pred_region
      %s124 = ssub.s32 16, 16
      %125 = vsyncadd [#allocation6], %s124
      %s127 = sshll.u32 [#allocation5], 4
      %s128 = int_to_ptr.vmem [resolvable:$true] %s127
      %130 = dma.vmem_to_hbm [thread:$0]  %s128, 16, %s5, [#allocation6]
    $region33: #{tpu_custom_call.1} parent=1 // pred_fallthru
      _
    // Predicated region
    $region34: #{tpu_custom_call.1} parent=1 // pred_check
      _
    $region35: #{tpu_custom_call.1} parent=1 // pred_check_branch
      %132 = sbr.rel (0) target = $region37
    $region36: #{tpu_custom_call.1} parent=1 // pred_region
      %133 = dma.done [#allocation4], 16
    $region37: #{tpu_custom_call.1} parent=1 // pred_fallthru
      _
    // Predicated region
    $region38: #{tpu_custom_call.1} parent=1 // pred_check
      _
    $region39: #{tpu_custom_call.1} parent=1 // pred_check_branch
      %135 = sbr.rel (0) target = $region41
    $region40: #{tpu_custom_call.1} parent=1 // pred_region
      %136 = dma.done [#allocation6], 16
    $region41: #{tpu_custom_call.1} parent=1 // pred_fallthru
      _
    %137 = vsyncpa [#allocation4], 1
    %138 = vsyncpa [#allocation6], 1

</llo_original>
